<compile_context>
chip_gen: v7x
topology: tpu7x:2x2x1
jax: 0.10.0
libtpu: 0.0.40
codegen_flags: <defaults>
</compile_context>

<pallas_src>
import functools

import jax
import jax.numpy as jnp
from jax import lax
from jax.experimental import pallas as pl
from jax.experimental.pallas import tpu as pltpu


def _round_up(x, m):
    return ((x + m - 1) // m) * m


def _vmem_budget():
    """(per-pass tile budget, vmem_limit_bytes), generation aware."""
    try:
        cap = int(pltpu.get_tpu_info().vmem_capacity_bytes)
    except Exception:
        cap = 64 << 20                      # assume the smaller (v7x) VMEM on failure
    vmem_limit = int(min((cap * 3) // 4, 96 << 20))
    budget = int(min(cap // 5, 20 << 20))
    return budget, vmem_limit


def _pick_rows_pass1(h, w, k, cout_p, budget):
    """Largest pass-1 row tile whose *real* VMEM footprint fits the budget.
    Lanes rounded to 128, sublanes to 16 (bf16) / 8 (f32); double-buffered
    input/output tiles, the weight block, the stats tile and the f32
    accumulator are all counted (the old 4 MiB/underestimating model was a
    v7x compile risk)."""
    w_bf = _round_up(w, 16)
    k_lane = _round_up(k, 128)
    w_blk = 2 * _round_up(k, 16) * cout_p * 2           # bf16 weights, double-buffered
    stats = 2 * 8 * cout_p * 4                           # f32 stats tile
    best = 1
    for tr in range(1, h + 1):
        x_t = 2 * tr * w_bf * k_lane * 2                 # bf16 input tile x2
        y_t = 2 * tr * w_bf * cout_p * 2                 # bf16 conv tile x2
        acc = tr * w_bf * cout_p * 4                     # f32 accumulator (vreg/VMEM)
        if x_t + y_t + acc + w_blk + stats <= budget:
            best = tr
        else:
            break
    return best


def _pick_rows_pass2(h_pad, w, cout_p, cout, budget):
    """Largest divisor of h_pad whose pass-2 tiles fit the budget.  Pass 2 has
    no matmul/scratch, so its blocking is independent of pass 1 and bigger."""
    w_bf = _round_up(w, 16)
    w_f32 = _round_up(w, 8)
    c_lane = _round_up(cout, 128)
    best = 1
    for tr in range(1, h_pad + 1):
        if h_pad % tr:
            continue
        in_t = 2 * tr * w_bf * cout_p * 2
        out_t = 2 * tr * w_f32 * c_lane * 4
        if in_t + out_t <= budget:
            best = tr
    return best


# ---------------------------------------------------------------------------
# Pass 1: one MXU matmul per tile (K = 9*Cin) + per-tile per-channel sum/sum_sq
# ---------------------------------------------------------------------------
def _conv_stats_kernel(x_ref, w_ref, y_ref, stats_ref, *, tr, valid_rows):
    # x_ref:     (1, TR, W, 9*Cin)  bf16  im2col'ed input tile
    # w_ref:     (9*Cin, Cout_p)    bf16  weights, Cout padded to 128 lanes
    # y_ref:     (1, TR, W, Cout_p) bf16  conv output (downcast AFTER stats)
    # stats_ref: (1, 1, 2, Cout_p)  f32   per-tile [sum, sum_sq] per channel
    _, trb, w_cols, k = x_ref.shape
    cout_p = w_ref.shape[-1]

    patch = x_ref[...].reshape(trb * w_cols, k)                       # (M, K) bf16
    acc = jnp.dot(patch, w_ref[...], preferred_element_type=jnp.float32)

    if valid_rows is None:
        stat_src = acc
    else:
        # H was padded up to a multiple of TR: keep pad rows out of the stats.
        row = (pl.program_id(1) * tr
               + lax.broadcasted_iota(jnp.int32, (trb * w_cols, 1), 0) // w_cols)
        stat_src = jnp.where(row < valid_rows, acc, 0.0)

    s1 = jnp.sum(stat_src, axis=0, keepdims=True)                     # (1, Cout_p)
    s2 = jnp.sum(stat_src * stat_src, axis=0, keepdims=True)          # (1, Cout_p)
    stats_ref[...] = jnp.concatenate([s1, s2], axis=0).reshape(1, 1, 2, cout_p)

    y_ref[...] = acc.astype(y_ref.dtype).reshape(1, trb, w_cols, cout_p)


# ---------------------------------------------------------------------------
# Pass 2: y = conv * scale + shift  (NO ReLU in the reference forward)
# ---------------------------------------------------------------------------
def _bn_apply_kernel(y_ref, scale_ref, shift_ref, o_ref):
    cout = o_ref.shape[-1]
    scale = scale_ref[...].reshape(1, 1, 1, cout)
    shift = shift_ref[...].reshape(1, 1, 1, cout)
    y = y_ref[...][..., :cout].astype(jnp.float32)     # drop channel padding
    o_ref[...] = y * scale + shift


def conv_bn_relu(x_nchw, weight_oihw, gamma, beta, *, eps=1e-5, row_tile=None):
    """x_nchw: (N, Cin, H, W); weight_oihw: (Cout, Cin, 3, 3); gamma/beta: (Cout,).
    Returns (N, Cout, H, W) f32, matching ConvBNReLU.forward (conv -> BN, no ReLU)."""
    N, Cin, H, W = x_nchw.shape
    Cout, Cin_w, KH, KW = weight_oihw.shape
    assert Cin_w == Cin and (KH, KW) == (3, 3), "specialized for ks=3, stride=1, pad=1"
    assert W % 8 == 0, "W must be a multiple of 8 (sublane-aligned in-kernel reshape)"
    # TODO(synk): pad W to a sublane multiple instead of asserting; and for large Cin
    # (3*Cin >= MXU depth) switch back to a kw-only fold with halo'ed row tiles.

    K = KH * KW * Cin                         # full 3x3 im2col contraction depth
    Cout_p = _round_up(Cout, 128)             # lane-dense channels in VMEM / on the MXU

    budget, vmem_limit = _vmem_budget()

    if row_tile is None:
        TR = max(1, min(_pick_rows_pass1(H, W, K, Cout_p, budget), H))
        if N == 1 and TR == H and H >= 2:
            TR = (H + 1) // 2                 # keep >= 2 grid steps for v7x megacore
    else:
        TR = int(row_tile)
    R = -(-H // TR)
    H_pad = R * TR                            # pad rows; masked out of the stats

    # ---------------- layout glue (plain XLA) ----------------
    # NCHW -> NHWC, cast to bf16 FIRST so pad/concat move half the bytes.
    x_nhwc = jnp.transpose(x_nchw, (0, 2, 3, 1)).astype(jnp.bfloat16)
    x_padded = jnp.pad(x_nhwc, ((0, 0), (1, 1 + (H_pad - H)), (1, 1), (0, 0)))
    # full 3x3 im2col: (N, H_pad, W, 9*Cin), tap index = (kh*3 + kw)*Cin + cin
    x_col = jnp.concatenate(
        [x_padded[:, kh:kh + H_pad, kw:kw + W, :]
         for kh in range(KH) for kw in range(KW)], axis=-1)

    # weights OIHW -> (9*Cin, Cout_p), same (kh, kw, cin) ordering, bf16
    w = jnp.transpose(weight_oihw, (2, 3, 1, 0)).reshape(K, Cout)
    w = jnp.pad(w, ((0, 0), (0, Cout_p - Cout))).astype(jnp.bfloat16)

    cparams = pltpu.CompilerParams(
        dimension_semantics=("parallel", "parallel"),
        vmem_limit_bytes=vmem_limit)

    # ---------------- pass 1: conv + per-tile BN statistics ----------------
    conv_bf, stats = pl.pallas_call(
        functools.partial(_conv_stats_kernel, tr=TR,
                          valid_rows=None if H_pad == H else H),
        grid=(N, R),
        in_specs=[
            pl.BlockSpec((1, TR, W, K), lambda n, r: (n, r, 0, 0)),
            pl.BlockSpec((K, Cout_p), lambda n, r: (0, 0)),
        ],
        out_specs=(
            pl.BlockSpec((1, TR, W, Cout_p), lambda n, r: (n, r, 0, 0)),
            pl.BlockSpec((1, 1, 2, Cout_p), lambda n, r: (n, r, 0, 0)),
        ),
        out_shape=(
            jax.ShapeDtypeStruct((N, H_pad, W, Cout_p), jnp.bfloat16),
            jax.ShapeDtypeStruct((N, R, 2, Cout_p), jnp.float32),
        ),
        compiler_params=cparams,
    )(x_col, w)

    # ---------------- finalize BN stats (tiny, plain XLA) ----------------
    # Single-pass E[x^2]-E[x]^2 in f32; adequate for O(1)-scaled conv outputs.
    # (For very large N*H*W, center per-tile stats or promote this reduction.)
    cnt = jnp.float32(N * H * W)
    tot = jnp.sum(stats, axis=(0, 1))                     # (2, Cout_p)
    mean = tot[0, :Cout] / cnt
    var = jnp.maximum(tot[1, :Cout] / cnt - mean * mean, 0.0)
    inv = lax.rsqrt(var + eps)
    scale = (gamma.astype(jnp.float32) * inv).reshape(1, Cout)
    shift = (beta.astype(jnp.float32) - mean * gamma.astype(jnp.float32) * inv
             ).reshape(1, Cout)

    # ---------------- pass 2: scale/shift, unpadded channels ----------------
    TR2 = _pick_rows_pass2(H_pad, W, Cout_p, Cout, budget)
    R2 = H_pad // TR2
    out_nhwc = pl.pallas_call(
        _bn_apply_kernel,
        grid=(N, R2),
        in_specs=[
            pl.BlockSpec((1, TR2, W, Cout_p), lambda n, r: (n, r, 0, 0)),
            pl.BlockSpec((1, Cout), lambda n, r: (0, 0)),
            pl.BlockSpec((1, Cout), lambda n, r: (0, 0)),
        ],
        out_specs=pl.BlockSpec((1, TR2, W, Cout), lambda n, r: (n, r, 0, 0)),
        out_shape=jax.ShapeDtypeStruct((N, H_pad, W, Cout), jnp.float32),
        compiler_params=cparams,
    )(conv_bf, scale, shift)

    if H_pad != H:
        out_nhwc = out_nhwc[:, :H]
    # NHWC -> NCHW to stay a drop-in for the PyTorch module (a fused NHWC
    # consumer could skip this transpose entirely).
    return jnp.transpose(out_nhwc, (0, 3, 1, 2))


def _reference(x_nchw, weight_oihw, gamma, beta, eps=1e-5, inter_dtype=None):
    # Same precision policy as the kernel: bf16 conv operands, f32 accumulation,
    # f32 batch statistics.  If inter_dtype is given the conv output is
    # round-tripped through it before the affine apply, mirroring the kernel's
    # bf16 intermediate.
    y = lax.conv_general_dilated(
        x_nchw.astype(jnp.bfloat16), weight_oihw.astype(jnp.bfloat16),
        window_strides=(1, 1), padding=((1, 1), (1, 1)),
        dimension_numbers=("NCHW", "OIHW", "NCHW"),
        preferred_element_type=jnp.float32)
    mean = jnp.mean(y, axis=(0, 2, 3), keepdims=True)
    var = jnp.mean((y - mean) ** 2, axis=(0, 2, 3), keepdims=True)
    y_app = y if inter_dtype is None else y.astype(inter_dtype).astype(jnp.float32)
    return (y_app - mean) * lax.rsqrt(var + eps) * gamma.reshape(1, -1, 1, 1) \
        + beta.reshape(1, -1, 1, 1)


if __name__ == "__main__":
    key = jax.random.PRNGKey(0)
    k_x, k_w = jax.random.split(key)

    N, Cin, Cout, H, W, KS = 2, 4, 8, 16, 16, 3

    x = jax.random.normal(k_x, (N, Cin, H, W), dtype=jnp.float32)

    # Deterministic kaiming_normal_(a=1): gain = sqrt(2/(1+1)) = 1,
    # std = gain / sqrt(fan_in), fan_in = Cin * ks * ks.
    fan_in = Cin * KS * KS
    weight = jax.random.normal(k_w, (Cout, Cin, KS, KS), dtype=jnp.float32) \
        / jnp.sqrt(jnp.float32(fan_in))

    # BatchNorm2d default affine init: gamma = 1, beta = 0.
    gamma = jnp.ones((Cout,), jnp.float32)
    beta = jnp.zeros((Cout,), jnp.float32)

    out_auto = conv_bn_relu(x, weight, gamma, beta)                 # auto tile pick
    out_tiled = conv_bn_relu(x, weight, gamma, beta, row_tile=8)    # multi-tile stats
    jax.block_until_ready((out_auto, out_tiled))

    ref_emul = _reference(x, weight, gamma, beta, inter_dtype=jnp.bfloat16)
    ref_f32 = _reference(x, weight, gamma, beta, inter_dtype=None)

    for out in (out_auto, out_tiled):
        assert out.shape == ref_f32.shape, "shape mismatch vs reference"
        # tight check vs a reference that models the bf16 conv intermediate
        assert jnp.allclose(out, ref_emul, atol=1e-2, rtol=1e-2), \
            "mismatch vs precision-matched reference"
        # looser check vs the f32-applied reference (bf16 intermediate rounding)
        assert jnp.allclose(out, ref_f32, atol=3e-2, rtol=3e-2), \
            "mismatch vs f32 reference"

    print("KERNEL_OK")
</pallas_src>

<mosaic_0001>
module attributes {stable_mosaic.version = 11 : i64} {
  func.func @_conv_stats_kernel(%arg0: i32, %arg1: i32, %arg2: memref<1x16x16x36xbf16, #tpu.memory_space<vmem>>, %arg3: memref<36x128xbf16, #tpu.memory_space<vmem>>, %arg4: memref<1x16x16x128xbf16, #tpu.memory_space<vmem>>, %arg5: memref<1x1x2x128xf32, #tpu.memory_space<vmem>>) attributes {dimension_semantics = [#tpu.dimension_semantics<parallel>, #tpu.dimension_semantics<parallel>], iteration_bounds = array<i64: 2, 1>, scalar_prefetch = 0 : i64, scratch_operands = 0 : i64, tpu.core_type = #tpu.core_type<tc>, window_params = [{transform_indices = @transform_0, window_bounds = array<i64: 1, 16, 16, 36>}, {pipeline_mode = #tpu.pipeline_mode<synchronous>, transform_indices = @transform_1, window_bounds = array<i64: 36, 128>}, {transform_indices = @transform_2, window_bounds = array<i64: 1, 16, 16, 128>}, {transform_indices = @transform_3, window_bounds = array<i64: 1, 1, 2, 128>}]} {
    %c0 = arith.constant 0 : index
    %c0_0 = arith.constant 0 : index
    %c0_1 = arith.constant 0 : index
    %c0_2 = arith.constant 0 : index
    %0 = vector.load %arg2[%c0, %c0_0, %c0_1, %c0_2] : memref<1x16x16x36xbf16, #tpu.memory_space<vmem>>, vector<1x16x16x36xbf16>
    %1 = vector.shape_cast %0 : vector<1x16x16x36xbf16> to vector<256x36xbf16>
    %c0_3 = arith.constant 0 : index
    %c0_4 = arith.constant 0 : index
    %2 = vector.load %arg3[%c0_3, %c0_4] : memref<36x128xbf16, #tpu.memory_space<vmem>>, vector<36x128xbf16>
    %cst = arith.constant dense<0.000000e+00> : vector<256x128xf32>
    %3 = tpu.matmul %1, %2, %cst {dimension_numbers = #tpu.dot_dimension_numbers<[1], [0], [0], [1], [0, 0, 1, 1], [], []>} : vector<256x36xbf16>, vector<36x128xbf16>, vector<256x128xf32> -> vector<256x128xf32>
    %cst_5 = arith.constant dense<0.000000e+00> : vector<128xf32>
    %4 = vector.multi_reduction <add>, %3, %cst_5 [0] : vector<256x128xf32> to vector<128xf32>
    %5 = vector.shape_cast %4 : vector<128xf32> to vector<1x128xf32>
    %6 = arith.mulf %3, %3 : vector<256x128xf32>
    %cst_6 = arith.constant dense<0.000000e+00> : vector<128xf32>
    %7 = vector.multi_reduction <add>, %6, %cst_6 [0] : vector<256x128xf32> to vector<128xf32>
    %8 = vector.shape_cast %7 : vector<128xf32> to vector<1x128xf32>
    %9 = tpu.concatenate %5, %8 in 0 : vector<1x128xf32>, vector<1x128xf32> -> vector<2x128xf32>
    %10 = vector.shape_cast %9 : vector<2x128xf32> to vector<1x1x2x128xf32>
    %c0_7 = arith.constant 0 : index
    %c0_8 = arith.constant 0 : index
    %c0_9 = arith.constant 0 : index
    %c0_10 = arith.constant 0 : index
    %11 = vector.load %arg5[%c0_7, %c0_8, %c0_9, %c0_10] : memref<1x1x2x128xf32, #tpu.memory_space<vmem>>, vector<1x1x2x128xf32>
    tpu.vector_store %arg5[%c0_7, %c0_8, %c0_9, %c0_10], %10 {strides = array<i32>} : memref<1x1x2x128xf32, #tpu.memory_space<vmem>>, vector<1x1x2x128xf32>,
    %12 = arith.truncf %3 : vector<256x128xf32> to vector<256x128xbf16>
    %13 = vector.shape_cast %12 : vector<256x128xbf16> to vector<1x16x16x128xbf16>
    %c0_11 = arith.constant 0 : index
    %c0_12 = arith.constant 0 : index
    %c0_13 = arith.constant 0 : index
    %c0_14 = arith.constant 0 : index
    %14 = vector.load %arg4[%c0_11, %c0_12, %c0_13, %c0_14] : memref<1x16x16x128xbf16, #tpu.memory_space<vmem>>, vector<1x16x16x128xbf16>
    tpu.vector_store %arg4[%c0_11, %c0_12, %c0_13, %c0_14], %13 {strides = array<i32>} : memref<1x16x16x128xbf16, #tpu.memory_space<vmem>>, vector<1x16x16x128xbf16>,
    return
  }
  func.func @transform_0(%arg0: i32, %arg1: i32) -> (i32, i32, i32, i32) {
    %c0_i32 = arith.constant 0 : i32
    %c0_i32_0 = arith.constant 0 : i32
    %c0_i32_1 = arith.constant 0 : i32
    return %arg0, %arg1, %c0_i32, %c0_i32_0 : i32, i32, i32, i32
  }
  func.func @transform_1(%arg0: i32, %arg1: i32) -> (i32, i32) {
    %c0_i32 = arith.constant 0 : i32
    %c0_i32_0 = arith.constant 0 : i32
    %c0_i32_1 = arith.constant 0 : i32
    return %c0_i32, %c0_i32_0 : i32, i32
  }
  func.func @transform_2(%arg0: i32, %arg1: i32) -> (i32, i32, i32, i32) {
    %c0_i32 = arith.constant 0 : i32
    %c0_i32_0 = arith.constant 0 : i32
    %c0_i32_1 = arith.constant 0 : i32
    return %arg0, %arg1, %c0_i32, %c0_i32_0 : i32, i32, i32, i32
  }
  func.func @transform_3(%arg0: i32, %arg1: i32) -> (i32, i32, i32, i32) {
    %c0_i32 = arith.constant 0 : i32
    %c0_i32_0 = arith.constant 0 : i32
    %c0_i32_1 = arith.constant 0 : i32
    return %arg0, %arg1, %c0_i32, %c0_i32_0 : i32, i32, i32, i32
  }
}

</mosaic_0001>

<llo_original>
// kernel: tpu_custom_call.1
$region0: #{tpu_custom_call.1}
  #allocation0 [shape = 'u32[]', space=smem, size = 0x4, offset = 0x4, fixed_abs, tag = 'smem constant byte address 0x4 - core index']
  #allocation1 [shape = 'u32[144,128]{1,0:T(1,128)}', space=vmem, size = 0x12000, scoped, tag = 'internal scratch']
  %s0 = inlined_call_operand.hbm [shape: bf16[2,16,16,36], index: 0, kind: input, shape index: {}]
  %s1 = inlined_call_operand.hbm [shape: bf16[36,128], index: 1, kind: input, shape index: {}]
  %s2 = inlined_call_operand.hbm [shape: bf16[2,16,16,128], index: 2, kind: output, shape index: {0}]
  %s3 = inlined_call_operand.hbm [shape: f32[2,1,2,128], index: 3, kind: output, shape index: {1}]
  %4 = xla_tuple %s2, %s3
  %s5 = sld [smem:[#allocation0]]
  $region57: #{tpu_custom_call.1} parent=0
    _
  %s7 = ssub.s32 1, %s5
  %s8 = scalar_select 0, %s7, %s5
  $region1: #{tpu_custom_call.1} parent=0
    #allocation2 [shape = 'u8[131072]{0}', space=vmem, size = 0x20000, scoped, tag = 'input window, operand 0']
    #allocation3 [shape = 's32[2]{0}', space=sflag, size = 0x8, scoped, tag = 'scoped memory for tpu_custom_call.1']
    #allocation4 [shape = 's32[2]{0}', space=sflag, size = 0x8, scoped, tag = 'scoped memory for tpu_custom_call.1']
    #allocation5 [shape = 'u8[10240]{0}', space=vmem, size = 0x2800, scoped, tag = 'input window, operand 1, single buffered']
    #allocation6 [shape = 's32[1]{0}', space=sflag, size = 0x4, scoped, tag = 'scoped memory for tpu_custom_call.1']
    #allocation7 [shape = 'u8[131072]{0}', space=vmem, size = 0x20000, scoped, tag = 'output window, operand 0']
    #allocation8 [shape = 'u8[2048]{0}', space=vmem, size = 0x800, scoped, tag = 'output window, operand 1']
    #allocation9 [shape = 's32[2]{0}', space=sflag, size = 0x8, scoped, tag = 'scoped memory for tpu_custom_call.1']
    %9 = vsyncpa [#allocation3], 0
    %s10 = scalar_lea.sflag [#allocation3], 1
    %11 = vsyncpa %s10, 0
    %12 = vsyncpa [#allocation6], 0
    %13 = vsyncpa [#allocation4], 0
    %s14 = scalar_lea.sflag [#allocation4], 1
    %15 = vsyncpa %s14, 0
    %16 = vsyncpa [#allocation9], 0
    %s17 = scalar_lea.sflag [#allocation9], 1
    %18 = vsyncpa %s17, 0
    loop: start=0, step=1, limit=4
    $region2: #{tpu_custom_call.1} parent=1 // loop_pre_header
      _
    $region3: #{tpu_custom_call.1} parent=1 // loop_header
      %s20 = sphi 0, %s24
      %p21 = scmp.ge.s32.totalorder %s20, 4
      %s27 = sphi 0, %s39
      %s28 = sphi 0, %s35
      %s29 = sphi 0, %s27
      %s30 = sphi 0, %s28
      %s31 = sphi 0, %s29
      %s32 = sphi 0, %s30
      %s44 = sphi 0, %s46
      %s47 = sphi 0, %s44
      %s48 = sphi 0, %s47
      %s64 = sphi 0, %s48
      %s68 = sphi 0, %s68
      %s70 = sphi 0, %s68
      %s71 = sphi 0, %s70
      %s85 = sphi 0, %s71
      %s93 = sphi 0, %s95
      %s96 = sphi 0, %s93
      %s97 = sphi 0, %s96
      %s113 = sphi 0, %s97
      %s121 = sphi 0, %s123
      %s124 = sphi 0, %s121
      %s125 = sphi 0, %s124
      %s141 = sphi 0, %s125
    $region4: #{tpu_custom_call.1} parent=1 // loop_header_branch
      %23 = sbr.rel (%p21) target = $region8
    $region5: #{tpu_custom_call.1} parent=1 // loop_body
      %s25 = ssub.s32 %s20, 1
      %s26 = ssub.s32 %s20, 2
      %s33 = sadd.s32 1, %s28
      %p34 = scmp.ge.s32.totalorder %s33, 1
      %s35 = scalar_select %p34, 0, %s33
      %s36 = sadd.s32 1, %s27
      %s37 = scalar_select %p34, %s36, %s27
      %p38 = scmp.ge.s32.totalorder %s37, 2
      %s39 = scalar_select %p38, 0, %s37
      %s40 = ssub.s32 %s27, %s39
      %s41 = ssub.s32 %s28, %s35
      %s42 = sor.u32 %s40, %s41
      %p43 = scmp.eq.s32.totalorder %s42, 0
      %s45 = sadd.s32 %s44, 1
      %s46 = scalar_select %p43, %s44, %s45
      %p49 = pneg %p43
      %p50 = scmp.eq.s32.totalorder %s20, 1
      %p51 = por %p49, %p50
      %p52 = scmp.ne.s32.totalorder %s44, %s47
      %p53 = scmp.eq.s32.totalorder %s20, 0
      %p54 = por %p52, %p53
      %p55 = scmp.ne.s32.totalorder %s44, %s47
      %p56 = scmp.eq.s32.totalorder %s25, 1
      %p57 = por %p55, %p56
      %p58 = scmp.ne.s32.totalorder %s47, %s48
      %p59 = scmp.eq.s32.totalorder %s25, 0
      %p60 = por %p58, %p59
      %p61 = scmp.ne.s32.totalorder %s47, %s48
      %p62 = scmp.eq.s32.totalorder %s26, 1
      %p63 = por %p61, %p62
      %p65 = scmp.ne.s32.totalorder %s48, %s64
      %p66 = scmp.eq.s32.totalorder %s26, 0
      %p67 = por %p65, %p66
      %s69 = sadd.s32 %s68, 1
      %p72 = scmp.eq.s32.totalorder %s20, 1
      %p73 = scmp.ne.s32.totalorder %s68, %s70
      %p74 = scmp.eq.s32.totalorder %s20, 0
      %p75 = por %p73, %p74
      %p76 = scmp.ne.s32.totalorder %s68, %s70
      %p77 = scmp.eq.s32.totalorder %s25, 1
      %p78 = por %p76, %p77
      %p79 = scmp.ne.s32.totalorder %s70, %s71
      %p80 = scmp.eq.s32.totalorder %s25, 0
      %p81 = por %p79, %p80
      %p82 = scmp.ne.s32.totalorder %s70, %s71
      %p83 = scmp.eq.s32.totalorder %s26, 1
      %p84 = por %p82, %p83
      %p86 = scmp.ne.s32.totalorder %s71, %s85
      %p87 = scmp.eq.s32.totalorder %s26, 0
      %p88 = por %p86, %p87
      %s89 = ssub.s32 %s27, %s39
      %s90 = ssub.s32 %s28, %s35
      %s91 = sor.u32 %s89, %s90
      %p92 = scmp.eq.s32.totalorder %s91, 0
      %s94 = sadd.s32 %s93, 1
      %s95 = scalar_select %p92, %s93, %s94
      %p98 = pneg %p92
      %p99 = scmp.eq.s32.totalorder %s20, 1
      %p100 = por %p98, %p99
      %p101 = scmp.ne.s32.totalorder %s93, %s96
      %p102 = scmp.eq.s32.totalorder %s20, 0
      %p103 = por %p101, %p102
      %p104 = scmp.ne.s32.totalorder %s93, %s96
      %p105 = scmp.eq.s32.totalorder %s25, 1
      %p106 = por %p104, %p105
      %p107 = scmp.ne.s32.totalorder %s96, %s97
      %p108 = scmp.eq.s32.totalorder %s25, 0
      %p109 = por %p107, %p108
      %p110 = scmp.ne.s32.totalorder %s96, %s97
      %p111 = scmp.eq.s32.totalorder %s26, 1
      %p112 = por %p110, %p111
      %p114 = scmp.ne.s32.totalorder %s97, %s113
      %p115 = scmp.eq.s32.totalorder %s26, 0
      %p116 = por %p114, %p115
      %s117 = ssub.s32 %s27, %s39
      %s118 = ssub.s32 %s28, %s35
      %s119 = sor.u32 %s117, %s118
      %p120 = scmp.eq.s32.totalorder %s119, 0
      %s122 = sadd.s32 %s121, 1
      %s123 = scalar_select %p120, %s121, %s122
      %p126 = pneg %p120
      %p127 = scmp.eq.s32.totalorder %s20, 1
      %p128 = por %p126, %p127
      %p129 = scmp.ne.s32.totalorder %s121, %s124
      %p130 = scmp.eq.s32.totalorder %s20, 0
      %p131 = por %p129, %p130
      %p132 = scmp.ne.s32.totalorder %s121, %s124
      %p133 = scmp.eq.s32.totalorder %s25, 1
      %p134 = por %p132, %p133
      %p135 = scmp.ne.s32.totalorder %s124, %s125
      %p136 = scmp.eq.s32.totalorder %s25, 0
      %p137 = por %p135, %p136
      %p138 = scmp.ne.s32.totalorder %s124, %s125
      %p139 = scmp.eq.s32.totalorder %s26, 1
      %p140 = por %p138, %p139
      %p142 = scmp.ne.s32.totalorder %s125, %s141
      %p143 = scmp.eq.s32.totalorder %s26, 0
      %p144 = por %p142, %p143
      %p145 = scmp.le.s32.totalorder 1, %s20
      %p146 = scmp.lt.s32.totalorder %s20, 3
      %p147 = pnand %p145, %p146
      %p148 = pneg %p147
      // Predicated region
      $region9: #{tpu_custom_call.1} parent=5 // pred_check
        _
      $region10: #{tpu_custom_call.1} parent=5 // pred_check_branch
        %150 = sbr.rel (%p147) target = $region12
      $region11: #{tpu_custom_call.1} parent=5 // pred_region
        %s151 = ssub.s32 %s20, 1
        // Predicated region
        $region13: #{tpu_custom_call.1} parent=11 // pred_check
          %p152 = pneg %p81
        $region14: #{tpu_custom_call.1} parent=11 // pred_check_branch
          %154 = sbr.rel (%p152) target = $region16
        $region15: #{tpu_custom_call.1} parent=11 // pred_region
          %s156 = ssub.s32 320, 320
          %157 = vsyncadd [#allocation6], %s156
          %s158 = sshll.u32 [#allocation5], 4
          %s159 = int_to_ptr.vmem [resolvable:$true] %s158
          %164 = dma.hbm_to_vmem [thread:$0]  %s1, 320, %s159, [#allocation6], 64, 64, 4
        $region16: #{tpu_custom_call.1} parent=11 // pred_fallthru
          _
      $region12: #{tpu_custom_call.1} parent=5 // pred_fallthru
        _
      %p165 = scmp.lt.s32.totalorder %s20, 2
      // Predicated region
      $region17: #{tpu_custom_call.1} parent=5 // pred_check
        %p166 = pneg %p165
      $region18: #{tpu_custom_call.1} parent=5 // pred_check_branch
        %168 = sbr.rel (%p166) target = $region20
      $region19: #{tpu_custom_call.1} parent=5 // pred_region
        // Predicated region
        $region21: #{tpu_custom_call.1} parent=19 // pred_check
          %p169 = pneg %p54
        $region22: #{tpu_custom_call.1} parent=19 // pred_check_branch
          %171 = sbr.rel (%p169) target = $region24
        $region23: #{tpu_custom_call.1} parent=19 // pred_region
          %s172 = sand.u32 %s44, 1
          %s173 = scalar_lea.sflag [#allocation3], %s172
          %s174 = sand.u32 %s44, 1
          %s175 = smul.addr %s174, 128
          %s176 = scalar_lea.vmem [#allocation2], %s175
          %s177 = smul.u32 16, %s28
          %s179 = ssub.s32 2048, 2048
          %180 = vsyncadd %s173, %s179
          %s181 = smul.addr %s177, 2
          %s182 = smul.addr %s27, 32
          %s183 = sadd.s32 %s181, %s182
          %s184 = smul.addr %s183, 64
          %s185 = scalar_lea.hbm %s0, %s184
          %s186 = sshll.u32 %s176, 4
          %s187 = int_to_ptr.vmem [resolvable:$true] %s186
          %192 = dma.hbm_to_vmem [thread:$0]  %s185, 2048, %s187, %s173, 64, 64, 4
        $region24: #{tpu_custom_call.1} parent=19 // pred_fallthru
          _
      $region20: #{tpu_custom_call.1} parent=5 // pred_fallthru
        _
      %p193 = scmp.le.s32.totalorder 1, %s20
      %p194 = scmp.lt.s32.totalorder %s20, 3
      %p195 = pnand %p193, %p194
      %p196 = pneg %p195
      // Predicated region
      $region25: #{tpu_custom_call.1} parent=5 // pred_check
        _
      $region26: #{tpu_custom_call.1} parent=5 // pred_check_branch
        %198 = sbr.rel (%p195) target = $region28
      $region27: #{tpu_custom_call.1} parent=5 // pred_region
        %s199 = ssub.s32 %s20, 1
        %s200 = sand.u32 %s47, 1
        %s201 = scalar_lea.sflag [#allocation3], %s200
        %s202 = sand.u32 %s47, 1
        %s203 = smul.addr %s202, 128
        %s204 = scalar_lea.vmem [#allocation2], %s203
        // Predicated region
        $region29: #{tpu_custom_call.1} parent=27 // pred_check
          %p205 = pneg %p60
        $region30: #{tpu_custom_call.1} parent=27 // pred_check_branch
          %207 = sbr.rel (%p205) target = $region32
        $region31: #{tpu_custom_call.1} parent=27 // pred_region
          %208 = dma.done %s201, 2048
        $region32: #{tpu_custom_call.1} parent=27 // pred_fallthru
          _
        // Predicated region
        $region33: #{tpu_custom_call.1} parent=27 // pred_check
          %p209 = pneg %p81
        $region34: #{tpu_custom_call.1} parent=27 // pred_check_branch
          %211 = sbr.rel (%p209) target = $region36
        $region35: #{tpu_custom_call.1} parent=27 // pred_region
          %212 = dma.done [#allocation6], 320
        $region36: #{tpu_custom_call.1} parent=27 // pred_fallthru
          _
        %s213 = sand.u32 %s47, 1
        %s214 = scalar_lea.sflag [#allocation3], %s213
        %s215 = sand.u32 %s47, 1
        %s216 = smul.addr %s215, 128
        %s217 = scalar_lea.vmem [#allocation2], %s216
        %p218 = pneg %p60
        %p219 = pneg %p57
        %p220 = pneg %p81
        %p221 = pneg %p78
        %p222 = pneg %p109
        %p223 = pneg %p106
        %s224 = sand.u32 %s96, 1
        %s225 = scalar_lea.sflag [#allocation4], %s224
        %s226 = sand.u32 %s96, 1
        %s227 = smul.addr %s226, 128
        %s228 = scalar_lea.vmem [#allocation7], %s227
        %p229 = pneg %p137
        %p230 = pneg %p134
        %s231 = sand.u32 %s124, 1
        %s232 = scalar_lea.sflag [#allocation9], %s231
        %s233 = sand.u32 %s124, 1
        %s234 = smul.addr %s233, 2
        %s235 = scalar_lea.vmem [#allocation8], %s234
        %s236 = smul.u32 16, %s30
        %s237 = smul.u32 16, %s30
        %v239 = vld [vmem:[%s204] sm:$0xf]
        %v240 = vld [vmem:[%s204 + $0x4] sm:$0xf]
        %v241 = vld [vmem:[%s204 + $0x8] sm:$0xf]
        %v242 = vld [vmem:[%s204 + $0xc] sm:$0xf]
        %v243 = vld [vmem:[%s204 + $0x10] sm:$0xf]
        %v244 = vld [vmem:[%s204 + $0x14] sm:$0xf]
        %v245 = vld [vmem:[%s204 + $0x18] sm:$0xf]
        %v246 = vld [vmem:[%s204 + $0x1c] sm:$0xf]
        %v247 = vld [vmem:[%s204 + $0x20] sm:$0xf]
        %v248 = vld [vmem:[%s204 + $0x24] sm:$0xf]
        %v249 = vld [vmem:[%s204 + $0x28] sm:$0xf]
        %v250 = vld [vmem:[%s204 + $0x2c] sm:$0xf]
        %v251 = vld [vmem:[%s204 + $0x30] sm:$0xf]
        %v252 = vld [vmem:[%s204 + $0x34] sm:$0xf]
        %v253 = vld [vmem:[%s204 + $0x38] sm:$0xf]
        %v254 = vld [vmem:[%s204 + $0x3c] sm:$0xf]
        %v255 = vld [vmem:[%s204 + $0x40] sm:$0xf]
        %v256 = vld [vmem:[%s204 + $0x44] sm:$0xf]
        %v257 = vld [vmem:[%s204 + $0x48] sm:$0xf]
        %v258 = vld [vmem:[%s204 + $0x4c] sm:$0xf]
        %v259 = vld [vmem:[%s204 + $0x50] sm:$0xf]
        %v260 = vld [vmem:[%s204 + $0x54] sm:$0xf]
        %v261 = vld [vmem:[%s204 + $0x58] sm:$0xf]
        %v262 = vld [vmem:[%s204 + $0x5c] sm:$0xf]
        %v263 = vld [vmem:[%s204 + $0x60] sm:$0xf]
        %v264 = vld [vmem:[%s204 + $0x64] sm:$0xf]
        %v265 = vld [vmem:[%s204 + $0x68] sm:$0xf]
        %v266 = vld [vmem:[%s204 + $0x6c] sm:$0xf]
        %v267 = vld [vmem:[%s204 + $0x70] sm:$0xf]
        %v268 = vld [vmem:[%s204 + $0x74] sm:$0xf]
        %v269 = vld [vmem:[%s204 + $0x78] sm:$0xf]
        %v270 = vld [vmem:[%s204 + $0x7c] sm:$0xf]
        %v271 = vld [vmem:[#allocation5] sm:$0xf]
        %v272 = vld [vmem:[#allocation5 + $0x4] sm:$0xf]
        %v273 = vld [vmem:[#allocation5 + $0x8] sm:$0xf]
        %v274 = vld [vmem:[#allocation5 + $0xc] sm:$0xf]
        %v275 = vld [vmem:[#allocation5 + $0x10] sm:$0x3]
        %v308 = vunpack.c.l.b16 %v239
        %v309 = vunpack.c.l.b16 %v240
        %v310 = vunpack.c.l.b16 %v241
        %v311 = vunpack.c.l.b16 %v242
        %v312 = vunpack.c.l.b16 %v243
        %v313 = vunpack.c.l.b16 %v244
        %v314 = vunpack.c.l.b16 %v245
        %v315 = vunpack.c.l.b16 %v246
        %v316 = vunpack.c.l.b16 %v247
        %v317 = vunpack.c.l.b16 %v248
        %v318 = vunpack.c.l.b16 %v249
        %v319 = vunpack.c.l.b16 %v250
        %v320 = vunpack.c.l.b16 %v251
        %v321 = vunpack.c.l.b16 %v252
        %v322 = vunpack.c.l.b16 %v253
        %v323 = vunpack.c.l.b16 %v254
        %v324 = vunpack.c.l.b16 %v255
        %v325 = vunpack.c.l.b16 %v256
        %v326 = vunpack.c.l.b16 %v257
        %v327 = vunpack.c.l.b16 %v258
        %v328 = vunpack.c.l.b16 %v259
        %v329 = vunpack.c.l.b16 %v260
        %v330 = vunpack.c.l.b16 %v261
        %v331 = vunpack.c.l.b16 %v262
        %v332 = vunpack.c.l.b16 %v263
        %v333 = vunpack.c.l.b16 %v264
        %v334 = vunpack.c.l.b16 %v265
        %v335 = vunpack.c.l.b16 %v266
        %v336 = vunpack.c.l.b16 %v267
        %v337 = vunpack.c.l.b16 %v268
        %v338 = vunpack.c.l.b16 %v269
        %v339 = vunpack.c.l.b16 %v270
        %v340 = vpack.c.b16 %v309, %v308
        %v341 = vpack.c.b16 %v311, %v310
        %v342 = vpack.c.b16 %v313, %v312
        %v343 = vpack.c.b16 %v315, %v314
        %v344 = vpack.c.b16 %v317, %v316
        %v345 = vpack.c.b16 %v319, %v318
        %v346 = vpack.c.b16 %v321, %v320
        %v347 = vpack.c.b16 %v323, %v322
        %v348 = vpack.c.b16 %v325, %v324
        %v349 = vpack.c.b16 %v327, %v326
        %v350 = vpack.c.b16 %v329, %v328
        %v351 = vpack.c.b16 %v331, %v330
        %v352 = vpack.c.b16 %v333, %v332
        %v353 = vpack.c.b16 %v335, %v334
        %v354 = vpack.c.b16 %v337, %v336
        %v355 = vpack.c.b16 %v339, %v338
        %v361 = vunpack.c.l.b16 %v271
        %v362 = vunpack.c.l.b16 %v272
        %v363 = vunpack.c.l.b16 %v273
        %v364 = vunpack.c.l.b16 %v274
        %v365 = vunpack.c.l.b16 %v275
        %v366 = vpack.c.b16 %v362, %v361
        %v367 = vpack.c.b16 %v364, %v363
        %v368 = vpack.c.b16 %v365, %v365
        %vm371 = vcmask 293888
        %v373 = vsel %vm371, %v340, 0
        %v376 = vsel %vm371, %v341, 0
        %v379 = vsel %vm371, %v342, 0
        %v382 = vsel %vm371, %v343, 0
        %v385 = vsel %vm371, %v344, 0
        %v388 = vsel %vm371, %v345, 0
        %v391 = vsel %vm371, %v346, 0
        %v394 = vsel %vm371, %v347, 0
        %v397 = vsel %vm371, %v348, 0
        %v400 = vsel %vm371, %v349, 0
        %v403 = vsel %vm371, %v350, 0
        %v406 = vsel %vm371, %v351, 0
        %v409 = vsel %vm371, %v352, 0
        %v412 = vsel %vm371, %v353, 0
        %v415 = vsel %vm371, %v354, 0
        %v418 = vsel %vm371, %v355, 0
        %vm420 = vcmask 1041408
        %v422 = vsel %vm420, %v368, 0
        %424 = vmatprep.subr.bf16.mxu0 0
        %425 = vmatpush1.bf16.msra.mxu0 %v366
        %426 = vmatprep.subr.bf16.mxu0 0
        %427 = vmatpush1.bf16.msra.mxu0 %v367
        %428 = vmatprep.subr.bf16.mxu0 0
        %429 = vmatpush1.bf16.msra.mxu0 %v422
        %430 = vmatprep.subr.bf16.mxu0 0
        %431 = vmatpush1.bf16.msra.mxu0 0
        %432 = vmatprep.subr.bf16.mxu0 0
        %433 = vmatpush1.bf16.msra.mxu0 0
        %434 = vmatprep.subr.bf16.mxu0 0
        %435 = vmatpush1.bf16.msra.mxu0 0
        %436 = vmatprep.subr.bf16.mxu0 0
        %437 = vmatpush1.bf16.msra.mxu0 0
        %438 = vmatprep.subr.bf16.mxu0 0
        %439 = vmatpush1.bf16.msra.mxu0 0
        %440 = vmatprep.subr.bf16.mxu0 0
        %441 = vmatpush1.bf16.msra.mxu0 0
        %442 = vmatprep.subr.bf16.mxu0 0
        %443 = vmatpush1.bf16.msra.mxu0 0
        %444 = vmatprep.subr.bf16.mxu0 0
        %445 = vmatpush1.bf16.msra.mxu0 0
        %446 = vmatprep.subr.bf16.mxu0 0
        %447 = vmatpush1.bf16.msra.mxu0 0
        %448 = vmatprep.subr.bf16.mxu0 0
        %449 = vmatpush1.bf16.msra.mxu0 0
        %450 = vmatprep.subr.bf16.mxu0 0
        %451 = vmatpush1.bf16.msra.mxu0 0
        %452 = vmatprep.subr.bf16.mxu0 0
        %453 = vmatpush1.bf16.msra.mxu0 0
        %454 = vmatprep.subr.bf16.mxu0 0
        %455 = vmatpush1.bf16.msra.mxu0 0
        %456 = vmatprep.mubr.bf16.mxu0 0
        %457 = vmatmul.mubr.bf16.gmra.mrb[0].mxu0 %v373
        %v458 = vpop.f32.mrb[0].mxu0
        %v459 = vadd.f32 0.0, %v458
        %v460 = vpop.f32.mrb[0].mxu0
        %v461 = vpop.f32.mrb[0].mxu0
        %v462 = vadd.f32 0.0, %v461
        %v463 = vpop.f32.mrb[0].mxu0
        %464 = vmatprep.mubr.bf16.mxu0 0
        %465 = vmatmul.mubr.bf16.gmra.mrb[0].mxu0 %v376
        %v466 = vpop.f32.mrb[0].mxu0
        %v467 = vadd.f32 0.0, %v466
        %v468 = vpop.f32.mrb[0].mxu0
        %v469 = vpop.f32.mrb[0].mxu0
        %v470 = vadd.f32 0.0, %v469
        %v471 = vpop.f32.mrb[0].mxu0
        %472 = vmatprep.mubr.bf16.mxu0 0
        %473 = vmatmul.mubr.bf16.gmra.mrb[0].mxu0 %v379
        %v474 = vpop.f32.mrb[0].mxu0
        %v475 = vadd.f32 0.0, %v474
        %v476 = vpop.f32.mrb[0].mxu0
        %v477 = vpop.f32.mrb[0].mxu0
        %v478 = vadd.f32 0.0, %v477
        %v479 = vpop.f32.mrb[0].mxu0
        %480 = vmatprep.mubr.bf16.mxu0 0
        %481 = vmatmul.mubr.bf16.gmra.mrb[0].mxu0 %v382
        %v482 = vpop.f32.mrb[0].mxu0
        %v483 = vadd.f32 0.0, %v482
        %v484 = vpop.f32.mrb[0].mxu0
        %v485 = vpop.f32.mrb[0].mxu0
        %v486 = vadd.f32 0.0, %v485
        %v487 = vpop.f32.mrb[0].mxu0
        %488 = vmatprep.mubr.bf16.mxu0 0
        %489 = vmatmul.mubr.bf16.gmra.mrb[0].mxu0 %v385
        %v490 = vpop.f32.mrb[0].mxu0
        %v491 = vadd.f32 0.0, %v490
        %v492 = vpop.f32.mrb[0].mxu0
        %v493 = vpop.f32.mrb[0].mxu0
        %v494 = vadd.f32 0.0, %v493
        %v495 = vpop.f32.mrb[0].mxu0
        %496 = vmatprep.mubr.bf16.mxu0 0
        %497 = vmatmul.mubr.bf16.gmra.mrb[0].mxu0 %v388
        %v498 = vpop.f32.mrb[0].mxu0
        %v499 = vadd.f32 0.0, %v498
        %v500 = vpop.f32.mrb[0].mxu0
        %v501 = vpop.f32.mrb[0].mxu0
        %v502 = vadd.f32 0.0, %v501
        %v503 = vpop.f32.mrb[0].mxu0
        %504 = vmatprep.mubr.bf16.mxu0 0
        %505 = vmatmul.mubr.bf16.gmra.mrb[0].mxu0 %v391
        %v506 = vpop.f32.mrb[0].mxu0
        %v507 = vadd.f32 0.0, %v506
        %v508 = vpop.f32.mrb[0].mxu0
        %v509 = vpop.f32.mrb[0].mxu0
        %v510 = vadd.f32 0.0, %v509
        %v511 = vpop.f32.mrb[0].mxu0
        %512 = vmatprep.mubr.bf16.mxu0 0
        %513 = vmatmul.mubr.bf16.gmra.mrb[0].mxu0 %v394
        %v514 = vpop.f32.mrb[0].mxu0
        %v515 = vadd.f32 0.0, %v514
        %v516 = vpop.f32.mrb[0].mxu0
        %v517 = vpop.f32.mrb[0].mxu0
        %v518 = vadd.f32 0.0, %v517
        %v519 = vpop.f32.mrb[0].mxu0
        %520 = vmatprep.mubr.bf16.mxu0 0
        %521 = vmatmul.mubr.bf16.gmra.mrb[0].mxu0 %v397
        %v522 = vpop.f32.mrb[0].mxu0
        %v523 = vadd.f32 0.0, %v522
        %v524 = vpop.f32.mrb[0].mxu0
        %v525 = vpop.f32.mrb[0].mxu0
        %v526 = vadd.f32 0.0, %v525
        %v527 = vpop.f32.mrb[0].mxu0
        %528 = vmatprep.mubr.bf16.mxu0 0
        %529 = vmatmul.mubr.bf16.gmra.mrb[0].mxu0 %v400
        %v530 = vpop.f32.mrb[0].mxu0
        %v531 = vadd.f32 0.0, %v530
        %v532 = vpop.f32.mrb[0].mxu0
        %v533 = vpop.f32.mrb[0].mxu0
        %v534 = vadd.f32 0.0, %v533
        %v535 = vpop.f32.mrb[0].mxu0
        %536 = vmatprep.mubr.bf16.mxu0 0
        %537 = vmatmul.mubr.bf16.gmra.mrb[0].mxu0 %v403
        %v538 = vpop.f32.mrb[0].mxu0
        %v539 = vadd.f32 0.0, %v538
        %v540 = vpop.f32.mrb[0].mxu0
        %v541 = vpop.f32.mrb[0].mxu0
        %v542 = vadd.f32 0.0, %v541
        %v543 = vpop.f32.mrb[0].mxu0
        %544 = vmatprep.mubr.bf16.mxu0 0
        %545 = vmatmul.mubr.bf16.gmra.mrb[0].mxu0 %v406
        %v546 = vpop.f32.mrb[0].mxu0
        %v547 = vadd.f32 0.0, %v546
        %v548 = vpop.f32.mrb[0].mxu0
        %v549 = vpop.f32.mrb[0].mxu0
        %v550 = vadd.f32 0.0, %v549
        %v551 = vpop.f32.mrb[0].mxu0
        %552 = vmatprep.mubr.bf16.mxu0 0
        %553 = vmatmul.mubr.bf16.gmra.mrb[0].mxu0 %v409
        %v554 = vpop.f32.mrb[0].mxu0
        %v555 = vadd.f32 0.0, %v554
        %v556 = vpop.f32.mrb[0].mxu0
        %v557 = vpop.f32.mrb[0].mxu0
        %v558 = vadd.f32 0.0, %v557
        %v559 = vpop.f32.mrb[0].mxu0
        %560 = vmatprep.mubr.bf16.mxu0 0
        %561 = vmatmul.mubr.bf16.gmra.mrb[0].mxu0 %v412
        %v562 = vpop.f32.mrb[0].mxu0
        %v563 = vadd.f32 0.0, %v562
        %v564 = vpop.f32.mrb[0].mxu0
        %v565 = vpop.f32.mrb[0].mxu0
        %v566 = vadd.f32 0.0, %v565
        %v567 = vpop.f32.mrb[0].mxu0
        %568 = vmatprep.mubr.bf16.mxu0 0
        %569 = vmatmul.mubr.bf16.gmra.mrb[0].mxu0 %v415
        %v570 = vpop.f32.mrb[0].mxu0
        %v571 = vadd.f32 0.0, %v570
        %v572 = vpop.f32.mrb[0].mxu0
        %v573 = vpop.f32.mrb[0].mxu0
        %v574 = vadd.f32 0.0, %v573
        %v575 = vpop.f32.mrb[0].mxu0
        %576 = vmatprep.mubr.bf16.mxu0 0
        %577 = vmatmul.mubr.bf16.gmra.mrb[0].mxu0 %v418
        %v578 = vpop.f32.mrb[0].mxu0
        %v579 = vadd.f32 0.0, %v578
        %v580 = vpop.f32.mrb[0].mxu0
        %v581 = vpop.f32.mrb[0].mxu0
        %v582 = vadd.f32 0.0, %v581
        %v583 = vpop.f32.mrb[0].mxu0
        %584 = vdwg.mxu0
        %v585 = vadd.f32 %v459, %v462
        %v586 = vadd.f32 %v585, %v467
        %v587 = vadd.f32 %v586, %v470
        %v588 = vadd.f32 %v587, %v475
        %v589 = vadd.f32 %v588, %v478
        %v590 = vadd.f32 %v589, %v483
        %v591 = vadd.f32 %v590, %v486
        %v592 = vadd.f32 %v591, %v491
        %v593 = vadd.f32 %v592, %v494
        %v594 = vadd.f32 %v593, %v499
        %v595 = vadd.f32 %v594, %v502
        %v596 = vadd.f32 %v595, %v507
        %v597 = vadd.f32 %v596, %v510
        %v598 = vadd.f32 %v597, %v515
        %v599 = vadd.f32 %v598, %v518
        %v600 = vadd.f32 %v599, %v523
        %v601 = vadd.f32 %v600, %v526
        %v602 = vadd.f32 %v601, %v531
        %v603 = vadd.f32 %v602, %v534
        %v604 = vadd.f32 %v603, %v539
        %v605 = vadd.f32 %v604, %v542
        %v606 = vadd.f32 %v605, %v547
        %v607 = vadd.f32 %v606, %v550
        %v608 = vadd.f32 %v607, %v555
        %v609 = vadd.f32 %v608, %v558
        %v610 = vadd.f32 %v609, %v563
        %v611 = vadd.f32 %v610, %v566
        %v612 = vadd.f32 %v611, %v571
        %v613 = vadd.f32 %v612, %v574
        %v614 = vadd.f32 %v613, %v579
        %v615 = vadd.f32 %v614, %v582
        %v616 = vrot.slane %v615, 4
        %v617 = vadd.f32 %v615, %v616
        %v618 = vrot.slane %v617, 2
        %v619 = vadd.f32 %v617, %v618
        %v620 = vrot.slane %v619, 1
        %v621 = vadd.f32 %v619, %v620
        %v622 = vmul.f32 %v459, %v459
        %v623 = vmul.f32 %v462, %v462
        %v624 = vmul.f32 %v467, %v467
        %v625 = vmul.f32 %v470, %v470
        %v626 = vmul.f32 %v475, %v475
        %v627 = vmul.f32 %v478, %v478
        %v628 = vmul.f32 %v483, %v483
        %v629 = vmul.f32 %v486, %v486
        %v630 = vmul.f32 %v491, %v491
        %v631 = vmul.f32 %v494, %v494
        %v632 = vmul.f32 %v499, %v499
        %v633 = vmul.f32 %v502, %v502
        %v634 = vmul.f32 %v507, %v507
        %v635 = vmul.f32 %v510, %v510
        %v636 = vmul.f32 %v515, %v515
        %v637 = vmul.f32 %v518, %v518
        %v638 = vmul.f32 %v523, %v523
        %v639 = vmul.f32 %v526, %v526
        %v640 = vmul.f32 %v531, %v531
        %v641 = vmul.f32 %v534, %v534
        %v642 = vmul.f32 %v539, %v539
        %v643 = vmul.f32 %v542, %v542
        %v644 = vmul.f32 %v547, %v547
        %v645 = vmul.f32 %v550, %v550
        %v646 = vmul.f32 %v555, %v555
        %v647 = vmul.f32 %v558, %v558
        %v648 = vmul.f32 %v563, %v563
        %v649 = vmul.f32 %v566, %v566
        %v650 = vmul.f32 %v571, %v571
        %v651 = vmul.f32 %v574, %v574
        %v652 = vmul.f32 %v579, %v579
        %v653 = vmul.f32 %v582, %v582
        %v654 = vadd.f32 %v622, %v623
        %v655 = vadd.f32 %v654, %v624
        %v656 = vadd.f32 %v655, %v625
        %v657 = vadd.f32 %v656, %v626
        %v658 = vadd.f32 %v657, %v627
        %v659 = vadd.f32 %v658, %v628
        %v660 = vadd.f32 %v659, %v629
        %v661 = vadd.f32 %v660, %v630
        %v662 = vadd.f32 %v661, %v631
        %v663 = vadd.f32 %v662, %v632
        %v664 = vadd.f32 %v663, %v633
        %v665 = vadd.f32 %v664, %v634
        %v666 = vadd.f32 %v665, %v635
        %v667 = vadd.f32 %v666, %v636
        %v668 = vadd.f32 %v667, %v637
        %v669 = vadd.f32 %v668, %v638
        %v670 = vadd.f32 %v669, %v639
        %v671 = vadd.f32 %v670, %v640
        %v672 = vadd.f32 %v671, %v641
        %v673 = vadd.f32 %v672, %v642
        %v674 = vadd.f32 %v673, %v643
        %v675 = vadd.f32 %v674, %v644
        %v676 = vadd.f32 %v675, %v645
        %v677 = vadd.f32 %v676, %v646
        %v678 = vadd.f32 %v677, %v647
        %v679 = vadd.f32 %v678, %v648
        %v680 = vadd.f32 %v679, %v649
        %v681 = vadd.f32 %v680, %v650
        %v682 = vadd.f32 %v681, %v651
        %v683 = vadd.f32 %v682, %v652
        %v684 = vadd.f32 %v683, %v653
        %v685 = vrot.slane %v684, 4
        %v686 = vadd.f32 %v684, %v685
        %v687 = vrot.slane %v686, 2
        %v688 = vadd.f32 %v686, %v687
        %v689 = vrot.slane %v688, 1
        %v690 = vadd.f32 %v688, %v689
        %vm691 = vcmask 1040384
        %v692 = vsel %vm691, %v621, %v690
        %693 = vst [vmem:[%s235] sm:$0x3] %v692
        %v694 = vpack.c.bf16 %v462, %v459
        %v695 = vpack.c.bf16 %v470, %v467
        %v696 = vpack.c.bf16 %v478, %v475
        %v697 = vpack.c.bf16 %v486, %v483
        %v698 = vpack.c.bf16 %v494, %v491
        %v699 = vpack.c.bf16 %v502, %v499
        %v700 = vpack.c.bf16 %v510, %v507
        %v701 = vpack.c.bf16 %v518, %v515
        %v702 = vpack.c.bf16 %v526, %v523
        %v703 = vpack.c.bf16 %v534, %v531
        %v704 = vpack.c.bf16 %v542, %v539
        %v705 = vpack.c.bf16 %v550, %v547
        %v706 = vpack.c.bf16 %v558, %v555
        %v707 = vpack.c.bf16 %v566, %v563
        %v708 = vpack.c.bf16 %v574, %v571
        %v709 = vpack.c.bf16 %v582, %v579
        %v726 = vunpack.c.l.b16 %v694
        %v727 = vunpack.c.h.b16 %v694
        %v728 = vunpack.c.l.b16 %v695
        %v729 = vunpack.c.h.b16 %v695
        %v730 = vunpack.c.l.b16 %v696
        %v731 = vunpack.c.h.b16 %v696
        %v732 = vunpack.c.l.b16 %v697
        %v733 = vunpack.c.h.b16 %v697
        %v734 = vunpack.c.l.b16 %v698
        %v735 = vunpack.c.h.b16 %v698
        %v736 = vunpack.c.l.b16 %v699
        %v737 = vunpack.c.h.b16 %v699
        %v738 = vunpack.c.l.b16 %v700
        %v739 = vunpack.c.h.b16 %v700
        %v740 = vunpack.c.l.b16 %v701
        %v741 = vunpack.c.h.b16 %v701
        %v742 = vunpack.c.l.b16 %v702
        %v743 = vunpack.c.h.b16 %v702
        %v744 = vunpack.c.l.b16 %v703
        %v745 = vunpack.c.h.b16 %v703
        %v746 = vunpack.c.l.b16 %v704
        %v747 = vunpack.c.h.b16 %v704
        %v748 = vunpack.c.l.b16 %v705
        %v749 = vunpack.c.h.b16 %v705
        %v750 = vunpack.c.l.b16 %v706
        %v751 = vunpack.c.h.b16 %v706
        %v752 = vunpack.c.l.b16 %v707
        %v753 = vunpack.c.h.b16 %v707
        %v754 = vunpack.c.l.b16 %v708
        %v755 = vunpack.c.h.b16 %v708
        %v756 = vunpack.c.l.b16 %v709
        %v757 = vunpack.c.h.b16 %v709
        %v758 = vpack.c.b16 %v726, %v726
        %v759 = vpack.c.b16 %v727, %v727
        %v760 = vpack.c.b16 %v728, %v728
        %v761 = vpack.c.b16 %v729, %v729
        %v762 = vpack.c.b16 %v730, %v730
        %v763 = vpack.c.b16 %v731, %v731
        %v764 = vpack.c.b16 %v732, %v732
        %v765 = vpack.c.b16 %v733, %v733
        %v766 = vpack.c.b16 %v734, %v734
        %v767 = vpack.c.b16 %v735, %v735
        %v768 = vpack.c.b16 %v736, %v736
        %v769 = vpack.c.b16 %v737, %v737
        %v770 = vpack.c.b16 %v738, %v738
        %v771 = vpack.c.b16 %v739, %v739
        %v772 = vpack.c.b16 %v740, %v740
        %v773 = vpack.c.b16 %v741, %v741
        %v774 = vpack.c.b16 %v742, %v742
        %v775 = vpack.c.b16 %v743, %v743
        %v776 = vpack.c.b16 %v744, %v744
        %v777 = vpack.c.b16 %v745, %v745
        %v778 = vpack.c.b16 %v746, %v746
        %v779 = vpack.c.b16 %v747, %v747
        %v780 = vpack.c.b16 %v748, %v748
        %v781 = vpack.c.b16 %v749, %v749
        %v782 = vpack.c.b16 %v750, %v750
        %v783 = vpack.c.b16 %v751, %v751
        %v784 = vpack.c.b16 %v752, %v752
        %v785 = vpack.c.b16 %v753, %v753
        %v786 = vpack.c.b16 %v754, %v754
        %v787 = vpack.c.b16 %v755, %v755
        %v788 = vpack.c.b16 %v756, %v756
        %v789 = vpack.c.b16 %v757, %v757
        %822 = vst [vmem:[%s228] sm:$0xf] %v758
        %823 = vst [vmem:[%s228 + $0x4] sm:$0xf] %v759
        %824 = vst [vmem:[%s228 + $0x8] sm:$0xf] %v760
        %825 = vst [vmem:[%s228 + $0xc] sm:$0xf] %v761
        %826 = vst [vmem:[%s228 + $0x10] sm:$0xf] %v762
        %827 = vst [vmem:[%s228 + $0x14] sm:$0xf] %v763
        %828 = vst [vmem:[%s228 + $0x18] sm:$0xf] %v764
        %829 = vst [vmem:[%s228 + $0x1c] sm:$0xf] %v765
        %830 = vst [vmem:[%s228 + $0x20] sm:$0xf] %v766
        %831 = vst [vmem:[%s228 + $0x24] sm:$0xf] %v767
        %832 = vst [vmem:[%s228 + $0x28] sm:$0xf] %v768
        %833 = vst [vmem:[%s228 + $0x2c] sm:$0xf] %v769
        %834 = vst [vmem:[%s228 + $0x30] sm:$0xf] %v770
        %835 = vst [vmem:[%s228 + $0x34] sm:$0xf] %v771
        %836 = vst [vmem:[%s228 + $0x38] sm:$0xf] %v772
        %837 = vst [vmem:[%s228 + $0x3c] sm:$0xf] %v773
        %838 = vst [vmem:[%s228 + $0x40] sm:$0xf] %v774
        %839 = vst [vmem:[%s228 + $0x44] sm:$0xf] %v775
        %840 = vst [vmem:[%s228 + $0x48] sm:$0xf] %v776
        %841 = vst [vmem:[%s228 + $0x4c] sm:$0xf] %v777
        %842 = vst [vmem:[%s228 + $0x50] sm:$0xf] %v778
        %843 = vst [vmem:[%s228 + $0x54] sm:$0xf] %v779
        %844 = vst [vmem:[%s228 + $0x58] sm:$0xf] %v780
        %845 = vst [vmem:[%s228 + $0x5c] sm:$0xf] %v781
        %846 = vst [vmem:[%s228 + $0x60] sm:$0xf] %v782
        %847 = vst [vmem:[%s228 + $0x64] sm:$0xf] %v783
        %848 = vst [vmem:[%s228 + $0x68] sm:$0xf] %v784
        %849 = vst [vmem:[%s228 + $0x6c] sm:$0xf] %v785
        %850 = vst [vmem:[%s228 + $0x70] sm:$0xf] %v786
        %851 = vst [vmem:[%s228 + $0x74] sm:$0xf] %v787
        %852 = vst [vmem:[%s228 + $0x78] sm:$0xf] %v788
        %853 = vst [vmem:[%s228 + $0x7c] sm:$0xf] %v789
        %s854 = sand.u32 %s96, 1
        %s855 = scalar_lea.sflag [#allocation4], %s854
        %s856 = sand.u32 %s96, 1
        %s857 = smul.addr %s856, 128
        %s858 = scalar_lea.vmem [#allocation7], %s857
        %s859 = sand.u32 %s124, 1
        %s860 = scalar_lea.sflag [#allocation9], %s859
        %s861 = sand.u32 %s124, 1
        %s862 = smul.addr %s861, 2
        %s863 = scalar_lea.vmem [#allocation8], %s862
        // Predicated region
        $region37: #{tpu_custom_call.1} parent=27 // pred_check
          %p864 = pneg %p106
        $region38: #{tpu_custom_call.1} parent=27 // pred_check_branch
          %866 = sbr.rel (%p864) target = $region40
        $region39: #{tpu_custom_call.1} parent=27 // pred_region
          %s867 = smul.u32 16, %s30
          %s869 = ssub.s32 2048, 2048
          %870 = vsyncadd %s855, %s869
          %s871 = smul.addr %s867, 2
          %s872 = smul.addr %s29, 32
          %s873 = sadd.s32 %s871, %s872
          %s874 = smul.addr %s873, 64
          %s875 = scalar_lea.hbm %s2, %s874
          %s876 = sshll.u32 %s858, 4
          %s877 = int_to_ptr.vmem [resolvable:$true] %s876
          %882 = dma.vmem_to_hbm [thread:$0]  %s877, 2048, %s875, %s855, 64, 64, 4
        $region40: #{tpu_custom_call.1} parent=27 // pred_fallthru
          _
        // Predicated region
        $region41: #{tpu_custom_call.1} parent=27 // pred_check
          %p883 = pneg %p134
        $region42: #{tpu_custom_call.1} parent=27 // pred_check_branch
          %885 = sbr.rel (%p883) target = $region44
        $region43: #{tpu_custom_call.1} parent=27 // pred_region
          %s887 = ssub.s32 32, 32
          %888 = vsyncadd %s860, %s887
          %s889 = sadd.s32 %s30, %s29
          %s890 = smul.addr %s889, 32
          %s891 = scalar_lea.hbm %s3, %s890
          %s893 = sshll.u32 %s863, 4
          %s894 = int_to_ptr.vmem [resolvable:$true] %s893
          %896 = dma.vmem_to_hbm [thread:$0]  %s894, 32, %s891, %s860
        $region44: #{tpu_custom_call.1} parent=27 // pred_fallthru
          _
      $region28: #{tpu_custom_call.1} parent=5 // pred_fallthru
        _
      %p897 = scmp.le.s32.totalorder 2, %s20
      // Predicated region
      $region45: #{tpu_custom_call.1} parent=5 // pred_check
        %p898 = pneg %p897
      $region46: #{tpu_custom_call.1} parent=5 // pred_check_branch
        %900 = sbr.rel (%p898) target = $region48
      $region47: #{tpu_custom_call.1} parent=5 // pred_region
        %s901 = ssub.s32 %s20, 2
        // Predicated region
        $region49: #{tpu_custom_call.1} parent=47 // pred_check
          %p902 = pneg %p112
        $region50: #{tpu_custom_call.1} parent=47 // pred_check_branch
          %904 = sbr.rel (%p902) target = $region52
        $region51: #{tpu_custom_call.1} parent=47 // pred_region
          %s905 = sand.u32 %s97, 1
          %s906 = scalar_lea.sflag [#allocation4], %s905
          %s907 = sand.u32 %s97, 1
          %s908 = smul.addr %s907, 128
          %s909 = scalar_lea.vmem [#allocation7], %s908
          %910 = dma.done %s906, 2048
        $region52: #{tpu_custom_call.1} parent=47 // pred_fallthru
          _
        // Predicated region
        $region53: #{tpu_custom_call.1} parent=47 // pred_check
          %p911 = pneg %p140
        $region54: #{tpu_custom_call.1} parent=47 // pred_check_branch
          %913 = sbr.rel (%p911) target = $region56
        $region55: #{tpu_custom_call.1} parent=47 // pred_region
          %s914 = sand.u32 %s125, 1
          %s915 = scalar_lea.sflag [#allocation9], %s914
          %s916 = sand.u32 %s125, 1
          %s917 = smul.addr %s916, 2
          %s918 = scalar_lea.vmem [#allocation8], %s917
          %919 = dma.done %s915, 32
        $region56: #{tpu_custom_call.1} parent=47 // pred_fallthru
          _
      $region48: #{tpu_custom_call.1} parent=5 // pred_fallthru
        _
    $region6: #{tpu_custom_call.1} parent=1 // loop_footer
      %s24 = sadd.s32 1, %s20
    $region7: #{tpu_custom_call.1} parent=1 // loop_footer_branch
      %19 = sbr.rel target = $region3
    $region8: #{tpu_custom_call.1} parent=1 // loop_exit
      _
    %920 = vsyncpa [#allocation3], 1
    %s921 = scalar_lea.sflag [#allocation3], 1
    %922 = vsyncpa %s921, 1
    %923 = vsyncpa [#allocation6], 1
    %924 = vsyncpa [#allocation4], 1
    %s925 = scalar_lea.sflag [#allocation4], 1
    %926 = vsyncpa %s925, 1
    %927 = vsyncpa [#allocation9], 1
    %s928 = scalar_lea.sflag [#allocation9], 1
    %929 = vsyncpa %s928, 1

</llo_original>
